<compile_context>
chip_gen: v6e
topology: v6e:2x2x1
jax: 0.10.0
libtpu: 0.0.40
codegen_flags: <defaults>
</compile_context>

<pallas_src>
import functools

import jax
import jax.numpy as jnp
from jax.experimental import pallas as pl
from jax.experimental.pallas import tpu as pltpu


def _pick_lane_tile(gg, max_lanes=2048):
    """Lane-tile size for the flattened-spatial axis.

    Full GG when it is small or not a multiple of 128 (block must then equal
    the full dim); otherwise the largest multiple-of-128 divisor of GG that is
    <= max_lanes, which keeps double-buffered in+out blocks comfortably inside
    v5e's 16 MiB scoped VMEM (and v7x's 64 MiB total) at real YOLO scales.
    """
    if gg <= max_lanes or gg % 128 != 0:
        return gg
    t = (max_lanes // 128) * 128
    while t >= 128:
        if gg % t == 0:
            return t
        t -= 128
    return gg


def _yolo_kernel(mul_ref, x_ref, out_ref, *, stride, grid_size, lane_tile):
    """Decode one (batch, lane-tile) block of shape (A, C5, TG)."""
    j = pl.program_id(1)                               # lane-tile index over GG

    p = x_ref[...].astype(jnp.float32)                 # (A, C5, TG), f32 compute
    a, c5, tg = p.shape

    # Channel index (sublane axis) and flattened-spatial index (lane axis),
    # generated in-kernel — no HBM grid_x / grid_y inputs.
    c = jax.lax.broadcasted_iota(jnp.int32, (a, c5, tg), 1)
    kf = jax.lax.broadcasted_iota(jnp.int32, (a, c5, tg), 2).astype(jnp.float32)
    kf = kf + (j * lane_tile).astype(jnp.float32)
    # Exact integer row/col from the flattened index using f32 only:
    # +0.5 keeps the quotient strictly inside (m, m+1), so floor() is exact
    # despite rounding for any realistic GG (< 2^24).
    gy = jnp.floor((kf + 0.5) * (1.0 / grid_size))
    gx = kf - gy * grid_size

    is_wh = jnp.logical_or(c == 2, c == 3)

    # One exp over the whole tile; sigmoid(p) = 1 / (1 + exp(-p)) (stable).
    e = jnp.exp(jnp.where(is_wh, p, -p))
    nl = jnp.where(is_wh, e, 1.0 / (1.0 + e))

    # Additive grid offset: gx*stride on channel 0, gy*stride on channel 1.
    off = jnp.where(c == 0, gx, jnp.where(c == 1, gy, 0.0)) * stride

    # mul_ref is (A, C5, 1): stride for xy, raw anchor w/h for wh, 1 otherwise.
    out_ref[...] = (mul_ref[...] * nl + off).astype(out_ref.dtype)


def yolo_detection_forward(x, anchors, image_size, num_classes, targets=None):
    """JAX/Pallas equivalent of YOLODetection.forward (inference branch)."""
    B = x.shape[0]
    G = x.shape[2]
    A = len(anchors)
    C5 = num_classes + 5
    GG = G * G
    stride = float(image_size) / float(G)

    # Glue: NCHW (B, A*(C+5), G, G) -> (B, A, C5, G*G); keep native dtype
    # (bf16 inputs stay bf16 through the DMA, upcast happens in-kernel).
    xr = x.reshape(B, A, C5, GG)

    # Per-(anchor, channel) multiplier applied after the nonlinearity:
    #   c in {0,1}: stride            ((sigmoid + grid) * stride)
    #   c in {2,3}: anchor w / h      ((a/stride) * exp(p) * stride == a * exp(p))
    #   c >= 4   : 1                  (plain sigmoid for conf / class probs)
    anch = jnp.asarray(anchors, dtype=jnp.float32)      # (A, 2)
    mul = jnp.ones((A, C5), jnp.float32)
    mul = mul.at[:, 0].set(stride)
    mul = mul.at[:, 1].set(stride)
    mul = mul.at[:, 2].set(anch[:, 0])
    mul = mul.at[:, 3].set(anch[:, 1])
    mul = mul.reshape(A, C5, 1)

    TG = _pick_lane_tile(GG)
    grid = (B, GG // TG)

    kernel = functools.partial(
        _yolo_kernel, stride=stride, grid_size=float(G), lane_tile=TG
    )

    out = pl.pallas_call(
        kernel,
        out_shape=jax.ShapeDtypeStruct((B, A, C5, GG), jnp.float32),
        grid=grid,
        in_specs=[
            pl.BlockSpec((A, C5, 1), lambda b, j: (0, 0, 0)),          # per-channel mul
            pl.BlockSpec((None, A, C5, TG), lambda b, j: (b, 0, 0, j)),  # predictions
        ],
        out_specs=pl.BlockSpec((None, A, C5, TG), lambda b, j: (b, 0, 0, j)),
        compiler_params=pltpu.CompilerParams(
            dimension_semantics=("parallel", "parallel")
        ),
    )(mul, xr)

    # Glue back to the module's (B, A*G*G, C+5) layout. Consumers able to take
    # the kernel's lane-dense (B, A, C5, GG) layout should use `out` directly
    # and skip this transpose (it round-trips the tensor through HBM).
    output = jnp.transpose(out, (0, 1, 3, 2)).reshape(B, A * GG, C5)

    if targets is None:
        return output, 0
    # TODO(synk): training branch needs utils.utils.build_targets (external) and the
    # reference itself exit()s before the losses; only the inference path is implemented.
    raise NotImplementedError("Training branch (targets != None) not implemented.")


def _reference_forward(x, anchors, image_size, num_classes):
    """Pure-JAX transcription of the PyTorch forward (targets=None)."""
    B = x.shape[0]
    G = x.shape[2]
    A = len(anchors)
    C5 = num_classes + 5
    stride = image_size / G

    pred = jnp.transpose(
        x.astype(jnp.float32).reshape(B, A, C5, G, G), (0, 1, 3, 4, 2)
    )
    cx = jax.nn.sigmoid(pred[..., 0])
    cy = jax.nn.sigmoid(pred[..., 1])
    w = pred[..., 2]
    h = pred[..., 3]
    conf = jax.nn.sigmoid(pred[..., 4])
    cls = jax.nn.sigmoid(pred[..., 5:])

    grid_x = jnp.tile(jnp.arange(G, dtype=jnp.float32), (G, 1)).reshape(1, 1, G, G)
    grid_y = jnp.tile(jnp.arange(G, dtype=jnp.float32), (G, 1)).T.reshape(1, 1, G, G)
    sa = jnp.asarray([(aw / stride, ah / stride) for aw, ah in anchors], jnp.float32)
    anchor_w = sa[:, 0:1].reshape(1, A, 1, 1)
    anchor_h = sa[:, 1:2].reshape(1, A, 1, 1)

    boxes = jnp.stack(
        [cx + grid_x, cy + grid_y, jnp.exp(w) * anchor_w, jnp.exp(h) * anchor_h],
        axis=-1,
    )
    return jnp.concatenate(
        [
            boxes.reshape(B, -1, 4) * stride,
            conf.reshape(B, -1, 1),
            cls.reshape(B, -1, num_classes),
        ],
        axis=-1,
    )


if __name__ == "__main__":
    # Small, module-consistent shapes: 3 anchors, 3 classes -> C+5 = 8 channels
    # per anchor, NCHW input with C = A*(C+5) = 24, grid 16x16, image_size 64.
    anchors = [(10.0, 13.0), (16.0, 30.0), (33.0, 23.0)]
    num_classes = 3
    image_size = 64
    B, G = 2, 16
    A = len(anchors)
    C = A * (num_classes + 5)

    key = jax.random.PRNGKey(0)
    x = jax.random.normal(key, (B, C, G, G), dtype=jnp.float32)

    out, loss = yolo_detection_forward(x, anchors, image_size, num_classes, targets=None)
    out = jax.block_until_ready(out)

    ref = _reference_forward(x, anchors, image_size, num_classes)
    assert out.shape == (B, A * G * G, num_classes + 5), out.shape
    assert loss == 0
    assert jnp.allclose(out, ref, atol=1e-4, rtol=1e-5), float(jnp.abs(out - ref).max())

    print("KERNEL_OK")
</pallas_src>

<mosaic_0001>
module attributes {stable_mosaic.version = 11 : i64} {
  func.func @_yolo_kernel(%arg0: i32, %arg1: i32, %arg2: memref<3x8x1xf32, #tpu.memory_space<vmem>>, %arg3: memref<1x3x8x256xf32, #tpu.memory_space<vmem>>, %arg4: memref<1x3x8x256xf32, #tpu.memory_space<vmem>>) attributes {dimension_semantics = [#tpu.dimension_semantics<parallel>, #tpu.dimension_semantics<parallel>], iteration_bounds = array<i64: 2, 1>, scalar_prefetch = 0 : i64, scratch_operands = 0 : i64, tpu.core_type = #tpu.core_type<tc>, window_params = [{pipeline_mode = #tpu.pipeline_mode<synchronous>, transform_indices = @transform_0, window_bounds = array<i64: 3, 8, 1>}, {transform_indices = @transform_1, window_bounds = array<i64: 1, 3, 8, 256>}, {transform_indices = @transform_2, window_bounds = array<i64: 1, 3, 8, 256>}]} {
    %c0 = arith.constant 0 : index
    %c0_0 = arith.constant 0 : index
    %c0_1 = arith.constant 0 : index
    %c0_2 = arith.constant 0 : index
    %0 = vector.load %arg3[%c0, %c0_0, %c0_1, %c0_2] : memref<1x3x8x256xf32, #tpu.memory_space<vmem>>, vector<1x3x8x256xf32>
    %1 = vector.shape_cast %0 : vector<1x3x8x256xf32> to vector<3x8x256xf32>
    %2 = tpu.iota {dimensions = array<i32: 1>} : vector<3x8x256xi32>
    %3 = tpu.iota {dimensions = array<i32: 2>} : vector<3x8x256xi32>
    %4 = arith.sitofp %3 : vector<3x8x256xi32> to vector<3x8x256xf32>
    %c256_i32 = arith.constant 256 : i32
    %5 = arith.muli %arg1, %c256_i32 : i32
    %6 = arith.sitofp %5 : i32 to f32
    %7 = vector.broadcast %6 : f32 to vector<3x8x256xf32>
    %8 = arith.addf %4, %7 : vector<3x8x256xf32>
    %cst = arith.constant 5.000000e-01 : f32
    %9 = vector.broadcast %cst : f32 to vector<3x8x256xf32>
    %10 = arith.addf %8, %9 : vector<3x8x256xf32>
    %cst_3 = arith.constant 6.250000e-02 : f32
    %11 = vector.broadcast %cst_3 : f32 to vector<3x8x256xf32>
    %12 = arith.mulf %10, %11 : vector<3x8x256xf32>
    %13 = math.floor %12 : vector<3x8x256xf32>
    %cst_4 = arith.constant 1.600000e+01 : f32
    %14 = vector.broadcast %cst_4 : f32 to vector<3x8x256xf32>
    %15 = arith.mulf %13, %14 : vector<3x8x256xf32>
    %16 = arith.subf %8, %15 : vector<3x8x256xf32>
    %c2_i32 = arith.constant 2 : i32
    %17 = vector.broadcast %c2_i32 : i32 to vector<3x8x256xi32>
    %18 = arith.cmpi eq, %2, %17 : vector<3x8x256xi32>
    %c3_i32 = arith.constant 3 : i32
    %19 = vector.broadcast %c3_i32 : i32 to vector<3x8x256xi32>
    %20 = arith.cmpi eq, %2, %19 : vector<3x8x256xi32>
    %21 = arith.ori %18, %20 : vector<3x8x256xi1>
    %cst_5 = arith.constant 0.000000e+00 : f32
    %22 = vector.broadcast %cst_5 : f32 to vector<3x8x256xf32>
    %23 = arith.subf %22, %1 : vector<3x8x256xf32>
    %24 = arith.select %21, %1, %23 : vector<3x8x256xi1>, vector<3x8x256xf32>
    %25 = math.exp %24 : vector<3x8x256xf32>
    %cst_6 = arith.constant 1.000000e+00 : f32
    %26 = vector.broadcast %cst_6 : f32 to vector<3x8x256xf32>
    %27 = arith.addf %26, %25 : vector<3x8x256xf32>
    %cst_7 = arith.constant 1.000000e+00 : f32
    %28 = vector.broadcast %cst_7 : f32 to vector<3x8x256xf32>
    %29 = arith.divf %28, %27 : vector<3x8x256xf32>
    %30 = arith.select %21, %25, %29 : vector<3x8x256xi1>, vector<3x8x256xf32>
    %c0_i32 = arith.constant 0 : i32
    %31 = vector.broadcast %c0_i32 : i32 to vector<3x8x256xi32>
    %32 = arith.cmpi eq, %2, %31 : vector<3x8x256xi32>
    %c1_i32 = arith.constant 1 : i32
    %33 = vector.broadcast %c1_i32 : i32 to vector<3x8x256xi32>
    %34 = arith.cmpi eq, %2, %33 : vector<3x8x256xi32>
    %cst_8 = arith.constant 0.000000e+00 : f32
    %35 = vector.broadcast %cst_8 : f32 to vector<3x8x256xf32>
    %36 = arith.select %34, %13, %35 : vector<3x8x256xi1>, vector<3x8x256xf32>
    %37 = arith.select %32, %16, %36 : vector<3x8x256xi1>, vector<3x8x256xf32>
    %cst_9 = arith.constant 4.000000e+00 : f32
    %38 = vector.broadcast %cst_9 : f32 to vector<3x8x256xf32>
    %39 = arith.mulf %37, %38 : vector<3x8x256xf32>
    %c0_10 = arith.constant 0 : index
    %c0_11 = arith.constant 0 : index
    %c0_12 = arith.constant 0 : index
    %40 = vector.load %arg2[%c0_10, %c0_11, %c0_12] : memref<3x8x1xf32, #tpu.memory_space<vmem>>, vector<3x8x1xf32>
    %41 = vector.broadcast %40 : vector<3x8x1xf32> to vector<3x8x256xf32>
    %42 = arith.mulf %41, %30 : vector<3x8x256xf32>
    %43 = arith.addf %42, %39 : vector<3x8x256xf32>
    %c0_13 = arith.constant 0 : index
    %c0_14 = arith.constant 0 : index
    %c0_15 = arith.constant 0 : index
    %c0_16 = arith.constant 0 : index
    %44 = vector.load %arg4[%c0_13, %c0_14, %c0_15, %c0_16] : memref<1x3x8x256xf32, #tpu.memory_space<vmem>>, vector<1x3x8x256xf32>
    %45 = vector.shape_cast %44 : vector<1x3x8x256xf32> to vector<3x8x256xf32>
    %46 = vector.shape_cast %43 : vector<3x8x256xf32> to vector<1x3x8x256xf32>
    tpu.vector_store %arg4[%c0_13, %c0_14, %c0_15, %c0_16], %46 {strides = array<i32>} : memref<1x3x8x256xf32, #tpu.memory_space<vmem>>, vector<1x3x8x256xf32>,
    return
  }
  func.func @transform_0(%arg0: i32, %arg1: i32) -> (i32, i32, i32) {
    %c0_i32 = arith.constant 0 : i32
    %c0_i32_0 = arith.constant 0 : i32
    %c0_i32_1 = arith.constant 0 : i32
    %c0_i32_2 = arith.constant 0 : i32
    return %c0_i32, %c0_i32_0, %c0_i32_1 : i32, i32, i32
  }
  func.func @transform_1(%arg0: i32, %arg1: i32) -> (i32, i32, i32, i32) {
    %c0_i32 = arith.constant 0 : i32
    %c0_i32_0 = arith.constant 0 : i32
    %c0_i32_1 = arith.constant 0 : i32
    return %arg0, %c0_i32, %c0_i32_0, %arg1 : i32, i32, i32, i32
  }
  func.func @transform_2(%arg0: i32, %arg1: i32) -> (i32, i32, i32, i32) {
    %c0_i32 = arith.constant 0 : i32
    %c0_i32_0 = arith.constant 0 : i32
    %c0_i32_1 = arith.constant 0 : i32
    return %arg0, %c0_i32, %c0_i32_0, %arg1 : i32, i32, i32, i32
  }
}

</mosaic_0001>

<llo_original>
// kernel: tpu_custom_call.1
$region0: #{tpu_custom_call.1}
  #allocation0 [shape = 'u32[]', space=smem, size = 0x4, offset = 0x4, fixed_abs, tag = 'smem constant byte address 0x4 - core index']
  #allocation1 [shape = 'u32[144,128]{1,0:T(1,128)}', space=vmem, size = 0x12000, scoped, tag = 'internal scratch']
  %s0 = inlined_call_operand.vmem [shape: f32[3,8,1], index: 0, kind: input, shape index: {}]
  %s1 = inlined_call_operand.hbm [shape: f32[2,3,8,256], index: 1, kind: input, shape index: {}]
  %s2 = inlined_call_operand.hbm [shape: f32[2,3,8,256], index: 2, kind: output, shape index: {}]
  %s3 = sld [smem:[#allocation0]]
  $region45: #{tpu_custom_call.1} parent=0
    _
  %s5 = ssub.s32 1, %s3
  %s6 = scalar_select 0, %s5, %s3
  $region1: #{tpu_custom_call.1} parent=0
    #allocation2 [shape = 'u8[49152]{0}', space=vmem, size = 0xc000, scoped, tag = 'input window, operand 1']
    #allocation3 [shape = 's32[2]{0}', space=sflag, size = 0x8, scoped, tag = 'scoped memory for tpu_custom_call.1']
    #allocation4 [shape = 's32[2]{0}', space=sflag, size = 0x8, scoped, tag = 'scoped memory for tpu_custom_call.1']
    #allocation5 [shape = 'u8[49152]{0}', space=vmem, size = 0xc000, scoped, tag = 'output window, operand 0']
    %7 = vsyncpa [#allocation3], 0
    %s8 = scalar_lea.sflag [#allocation3], 1
    %9 = vsyncpa %s8, 0
    %10 = vsyncpa [#allocation4], 0
    %s11 = scalar_lea.sflag [#allocation4], 1
    %12 = vsyncpa %s11, 0
    loop: start=0, step=1, limit=4
    $region2: #{tpu_custom_call.1} parent=1 // loop_pre_header
      _
    $region3: #{tpu_custom_call.1} parent=1 // loop_header
      %s14 = sphi 0, %s18
      %p15 = scmp.ge.s32.totalorder %s14, 4
      %s21 = sphi 0, %s33
      %s22 = sphi 0, %s29
      %s23 = sphi 0, %s21
      %s24 = sphi 0, %s22
      %s25 = sphi 0, %s23
      %s26 = sphi 0, %s24
      %s34 = sphi 0, %s34
      %s36 = sphi 0, %s34
      %s37 = sphi 0, %s36
      %s51 = sphi 0, %s37
      %s59 = sphi 0, %s61
      %s62 = sphi 0, %s59
      %s63 = sphi 0, %s62
      %s79 = sphi 0, %s63
      %s87 = sphi 0, %s89
      %s90 = sphi 0, %s87
      %s91 = sphi 0, %s90
      %s107 = sphi 0, %s91
    $region4: #{tpu_custom_call.1} parent=1 // loop_header_branch
      %17 = sbr.rel (%p15) target = $region8
    $region5: #{tpu_custom_call.1} parent=1 // loop_body
      %s19 = ssub.s32 %s14, 1
      %s20 = ssub.s32 %s14, 2
      %s27 = sadd.s32 1, %s22
      %p28 = scmp.ge.s32.totalorder %s27, 1
      %s29 = scalar_select %p28, 0, %s27
      %s30 = sadd.s32 1, %s21
      %s31 = scalar_select %p28, %s30, %s21
      %p32 = scmp.ge.s32.totalorder %s31, 2
      %s33 = scalar_select %p32, 0, %s31
      %s35 = sadd.s32 %s34, 1
      %p38 = scmp.eq.s32.totalorder %s14, 1
      %p39 = scmp.ne.s32.totalorder %s34, %s36
      %p40 = scmp.eq.s32.totalorder %s14, 0
      %p41 = por %p39, %p40
      %p42 = scmp.ne.s32.totalorder %s34, %s36
      %p43 = scmp.eq.s32.totalorder %s19, 1
      %p44 = por %p42, %p43
      %p45 = scmp.ne.s32.totalorder %s36, %s37
      %p46 = scmp.eq.s32.totalorder %s19, 0
      %p47 = por %p45, %p46
      %p48 = scmp.ne.s32.totalorder %s36, %s37
      %p49 = scmp.eq.s32.totalorder %s20, 1
      %p50 = por %p48, %p49
      %p52 = scmp.ne.s32.totalorder %s37, %s51
      %p53 = scmp.eq.s32.totalorder %s20, 0
      %p54 = por %p52, %p53
      %s55 = ssub.s32 %s21, %s33
      %s56 = ssub.s32 %s22, %s29
      %s57 = sor.u32 %s55, %s56
      %p58 = scmp.eq.s32.totalorder %s57, 0
      %s60 = sadd.s32 %s59, 1
      %s61 = scalar_select %p58, %s59, %s60
      %p64 = pneg %p58
      %p65 = scmp.eq.s32.totalorder %s14, 1
      %p66 = por %p64, %p65
      %p67 = scmp.ne.s32.totalorder %s59, %s62
      %p68 = scmp.eq.s32.totalorder %s14, 0
      %p69 = por %p67, %p68
      %p70 = scmp.ne.s32.totalorder %s59, %s62
      %p71 = scmp.eq.s32.totalorder %s19, 1
      %p72 = por %p70, %p71
      %p73 = scmp.ne.s32.totalorder %s62, %s63
      %p74 = scmp.eq.s32.totalorder %s19, 0
      %p75 = por %p73, %p74
      %p76 = scmp.ne.s32.totalorder %s62, %s63
      %p77 = scmp.eq.s32.totalorder %s20, 1
      %p78 = por %p76, %p77
      %p80 = scmp.ne.s32.totalorder %s63, %s79
      %p81 = scmp.eq.s32.totalorder %s20, 0
      %p82 = por %p80, %p81
      %s83 = ssub.s32 %s21, %s33
      %s84 = ssub.s32 %s22, %s29
      %s85 = sor.u32 %s83, %s84
      %p86 = scmp.eq.s32.totalorder %s85, 0
      %s88 = sadd.s32 %s87, 1
      %s89 = scalar_select %p86, %s87, %s88
      %p92 = pneg %p86
      %p93 = scmp.eq.s32.totalorder %s14, 1
      %p94 = por %p92, %p93
      %p95 = scmp.ne.s32.totalorder %s87, %s90
      %p96 = scmp.eq.s32.totalorder %s14, 0
      %p97 = por %p95, %p96
      %p98 = scmp.ne.s32.totalorder %s87, %s90
      %p99 = scmp.eq.s32.totalorder %s19, 1
      %p100 = por %p98, %p99
      %p101 = scmp.ne.s32.totalorder %s90, %s91
      %p102 = scmp.eq.s32.totalorder %s19, 0
      %p103 = por %p101, %p102
      %p104 = scmp.ne.s32.totalorder %s90, %s91
      %p105 = scmp.eq.s32.totalorder %s20, 1
      %p106 = por %p104, %p105
      %p108 = scmp.ne.s32.totalorder %s91, %s107
      %p109 = scmp.eq.s32.totalorder %s20, 0
      %p110 = por %p108, %p109
      %p111 = scmp.le.s32.totalorder 1, %s14
      %p112 = scmp.lt.s32.totalorder %s14, 3
      %p113 = pnand %p111, %p112
      %p114 = pneg %p113
      // Predicated region
      $region9: #{tpu_custom_call.1} parent=5 // pred_check
        _
      $region10: #{tpu_custom_call.1} parent=5 // pred_check_branch
        %116 = sbr.rel (%p113) target = $region12
      $region11: #{tpu_custom_call.1} parent=5 // pred_region
        %s117 = ssub.s32 %s14, 1
        // Predicated region
        $region13: #{tpu_custom_call.1} parent=11 // pred_check
          %p118 = pneg %p47
        $region14: #{tpu_custom_call.1} parent=11 // pred_check_branch
          %120 = sbr.rel (%p118) target = $region16
        $region15: #{tpu_custom_call.1} parent=11 // pred_region
          _
        $region16: #{tpu_custom_call.1} parent=11 // pred_fallthru
          _
      $region12: #{tpu_custom_call.1} parent=5 // pred_fallthru
        _
      %p121 = scmp.lt.s32.totalorder %s14, 2
      // Predicated region
      $region17: #{tpu_custom_call.1} parent=5 // pred_check
        %p122 = pneg %p121
      $region18: #{tpu_custom_call.1} parent=5 // pred_check_branch
        %124 = sbr.rel (%p122) target = $region20
      $region19: #{tpu_custom_call.1} parent=5 // pred_region
        // Predicated region
        $region21: #{tpu_custom_call.1} parent=19 // pred_check
          %p125 = pneg %p69
        $region22: #{tpu_custom_call.1} parent=19 // pred_check_branch
          %127 = sbr.rel (%p125) target = $region24
        $region23: #{tpu_custom_call.1} parent=19 // pred_region
          %s128 = sand.u32 %s59, 1
          %s129 = scalar_lea.sflag [#allocation3], %s128
          %s130 = sand.u32 %s59, 1
          %s131 = smul.addr %s130, 48
          %s132 = scalar_lea.vmem [#allocation2], %s131
          %s133 = smul.u32 2, %s22
          %s135 = ssub.s32 768, 768
          %136 = vsyncadd %s129, %s135
          %s137 = smul.addr %s21, 6
          %s138 = sadd.s32 %s133, %s137
          %s139 = smul.addr %s138, 128
          %s140 = scalar_lea.hbm %s1, %s139
          %s141 = sshll.u32 %s132, 4
          %s142 = int_to_ptr.vmem [resolvable:$true] %s141
          %147 = dma.hbm_to_vmem [thread:$0]  %s140, 768, %s142, %s129, 256, 256, 16
        $region24: #{tpu_custom_call.1} parent=19 // pred_fallthru
          _
      $region20: #{tpu_custom_call.1} parent=5 // pred_fallthru
        _
      %p148 = scmp.le.s32.totalorder 1, %s14
      %p149 = scmp.lt.s32.totalorder %s14, 3
      %p150 = pnand %p148, %p149
      %p151 = pneg %p150
      // Predicated region
      $region25: #{tpu_custom_call.1} parent=5 // pred_check
        _
      $region26: #{tpu_custom_call.1} parent=5 // pred_check_branch
        %153 = sbr.rel (%p150) target = $region28
      $region27: #{tpu_custom_call.1} parent=5 // pred_region
        %s154 = ssub.s32 %s14, 1
        %s155 = sand.u32 %s62, 1
        %s156 = scalar_lea.sflag [#allocation3], %s155
        %s157 = sand.u32 %s62, 1
        %s158 = smul.addr %s157, 48
        %s159 = scalar_lea.vmem [#allocation2], %s158
        // Predicated region
        $region29: #{tpu_custom_call.1} parent=27 // pred_check
          %p160 = pneg %p75
        $region30: #{tpu_custom_call.1} parent=27 // pred_check_branch
          %162 = sbr.rel (%p160) target = $region32
        $region31: #{tpu_custom_call.1} parent=27 // pred_region
          %163 = dma.done %s156, 768
        $region32: #{tpu_custom_call.1} parent=27 // pred_fallthru
          _
        %p164 = pneg %p47
        %p165 = pneg %p44
        %s166 = sand.u32 %s62, 1
        %s167 = scalar_lea.sflag [#allocation3], %s166
        %s168 = sand.u32 %s62, 1
        %s169 = smul.addr %s168, 48
        %s170 = scalar_lea.vmem [#allocation2], %s169
        %p171 = pneg %p75
        %p172 = pneg %p72
        %p173 = pneg %p103
        %p174 = pneg %p100
        %s175 = sand.u32 %s90, 1
        %s176 = scalar_lea.sflag [#allocation4], %s175
        %s177 = sand.u32 %s90, 1
        %s178 = smul.addr %s177, 48
        %s179 = scalar_lea.vmem [#allocation5], %s178
        %s180 = smul.u32 2, %s24
        %s181 = smul.u32 2, %s24
        %v182 = vld [vmem:[%s159] sm:$0xff]
        %v183 = vld [vmem:[%s159 + $0x8] sm:$0xff]
        %v184 = vld [vmem:[%s159 + $0x10] sm:$0xff]
        %v185 = vld [vmem:[%s159 + $0x18] sm:$0xff]
        %v186 = vld [vmem:[%s159 + $0x20] sm:$0xff]
        %v187 = vld [vmem:[%s159 + $0x28] sm:$0xff]
        %v188 = vlaneseq
        %v189 = vshrl.u32 %v188, 7
        %v190 = vlaneseq
        %v191 = vand.u32 %v190, 127
        %v192 = vadd.s32 %v191, 128
        %v193 = vcvt.s32.f32 %v191
        %v194 = vcvt.s32.f32 %v192
        %s195 = smul.u32 %s24, 256
        %s196 = scvt.s32.f32 %s195
        %v197 = vstv %s196
        %v198 = vadd.f32 %v193, %v197
        %v199 = vadd.f32 %v194, %v197
        %v200 = vadd.f32 %v198, 0.5
        %v201 = vadd.f32 %v199, 0.5
        %v202 = vmul.f32 %v200, 0.0625
        %v203 = vmul.f32 %v201, 0.0625
        %v204 = vfloor.f32 %v202
        %v205 = vfloor.f32 %v203
        %v206 = vmul.f32 %v204, 16.0
        %v207 = vmul.f32 %v205, 16.0
        %v208 = vsub.f32 %v198, %v206
        %v209 = vsub.f32 %v199, %v207
        %vm210 = vcmp.eq.s32.totalorder %v189, 2
        %vm211 = vcmp.eq.s32.totalorder %v189, 3
        %vm212 = vmor %vm210, %vm211
        %v213 = vsub.f32 0.0, %v182
        %v214 = vsub.f32 0.0, %v183
        %v215 = vsub.f32 0.0, %v184
        %v216 = vsub.f32 0.0, %v185
        %v217 = vsub.f32 0.0, %v186
        %v218 = vsub.f32 0.0, %v187
        %v219 = vsel %vm212, %v182, %v213
        %v220 = vsel %vm212, %v183, %v214
        %v221 = vsel %vm212, %v184, %v215
        %v222 = vsel %vm212, %v185, %v216
        %v223 = vsel %vm212, %v186, %v217
        %v224 = vsel %vm212, %v187, %v218
        %v225 = vmul.f32 %v219, 1.442695
        %v226 = vpow.pop %v225
        %v227 = vmul.f32 %v220, 1.442695
        %v228 = vpow.pop %v227
        %v229 = vmul.f32 %v221, 1.442695
        %v230 = vpow.pop %v229
        %v231 = vmul.f32 %v222, 1.442695
        %v232 = vpow.pop %v231
        %v233 = vmul.f32 %v223, 1.442695
        %v234 = vpow.pop %v233
        %v235 = vmul.f32 %v224, 1.442695
        %v236 = vpow.pop %v235
        %v237 = vadd.f32 %v226, 1.0
        %v238 = vadd.f32 %v228, 1.0
        %v239 = vadd.f32 %v230, 1.0
        %v240 = vadd.f32 %v232, 1.0
        %v241 = vadd.f32 %v234, 1.0
        %v242 = vadd.f32 %v236, 1.0
        %v243 = vrcp.pop %v237
        %v244 = vmul.f32 1.0, %v243
        %v245 = vrcp.pop %v238
        %v246 = vmul.f32 1.0, %v245
        %v247 = vrcp.pop %v239
        %v248 = vmul.f32 1.0, %v247
        %v249 = vrcp.pop %v240
        %v250 = vmul.f32 1.0, %v249
        %v251 = vrcp.pop %v241
        %v252 = vmul.f32 1.0, %v251
        %v253 = vrcp.pop %v242
        %v254 = vmul.f32 1.0, %v253
        %v255 = vsel %vm212, %v226, %v244
        %v256 = vsel %vm212, %v228, %v246
        %v257 = vsel %vm212, %v230, %v248
        %v258 = vsel %vm212, %v232, %v250
        %v259 = vsel %vm212, %v234, %v252
        %v260 = vsel %vm212, %v236, %v254
        %vm261 = vcmp.eq.s32.totalorder %v189, 0
        %vm262 = vcmp.eq.s32.totalorder %v189, 1
        %v263 = vsel %vm262, %v204, 0.0
        %v264 = vsel %vm262, %v205, 0.0
        %v265 = vsel %vm261, %v208, %v263
        %v266 = vsel %vm261, %v209, %v264
        %v267 = vmul.f32 %v265, 4.0
        %v268 = vmul.f32 %v266, 4.0
        %v269 = vld [vmem:[%s0] sm:$0xff]
        %v270 = vld [vmem:[%s0 + $0x8] sm:$0xff]
        %v271 = vld [vmem:[%s0 + $0x10] sm:$0xff]
        %273 = vset.pattern.permute.xlu0 0
        %274 = vperm.xlu0 %273, %v269
        %v275 = vpop.permute.xlu0 %274
        %278 = vset.pattern.permute.xlu0 0
        %279 = vperm.xlu0 %278, %v270
        %v280 = vpop.permute.xlu0 %279
        %283 = vset.pattern.permute.xlu0 0
        %284 = vperm.xlu0 %283, %v271
        %v285 = vpop.permute.xlu0 %284
        %v287 = vmul.f32 %v275, %v255
        %v288 = vmul.f32 %v275, %v256
        %v289 = vmul.f32 %v280, %v257
        %v290 = vmul.f32 %v280, %v258
        %v291 = vmul.f32 %v285, %v259
        %v292 = vmul.f32 %v285, %v260
        %v293 = vadd.f32 %v287, %v267
        %v294 = vadd.f32 %v288, %v268
        %v295 = vadd.f32 %v289, %v267
        %v296 = vadd.f32 %v290, %v268
        %v297 = vadd.f32 %v291, %v267
        %v298 = vadd.f32 %v292, %v268
        %299 = vst [vmem:[%s179] sm:$0xff] %v293
        %300 = vst [vmem:[%s179 + $0x8] sm:$0xff] %v294
        %301 = vst [vmem:[%s179 + $0x10] sm:$0xff] %v295
        %302 = vst [vmem:[%s179 + $0x18] sm:$0xff] %v296
        %303 = vst [vmem:[%s179 + $0x20] sm:$0xff] %v297
        %304 = vst [vmem:[%s179 + $0x28] sm:$0xff] %v298
        %s305 = sand.u32 %s90, 1
        %s306 = scalar_lea.sflag [#allocation4], %s305
        %s307 = sand.u32 %s90, 1
        %s308 = smul.addr %s307, 48
        %s309 = scalar_lea.vmem [#allocation5], %s308
        // Predicated region
        $region33: #{tpu_custom_call.1} parent=27 // pred_check
          %p310 = pneg %p100
        $region34: #{tpu_custom_call.1} parent=27 // pred_check_branch
          %312 = sbr.rel (%p310) target = $region36
        $region35: #{tpu_custom_call.1} parent=27 // pred_region
          %s313 = smul.u32 2, %s24
          %s315 = ssub.s32 768, 768
          %316 = vsyncadd %s306, %s315
          %s317 = smul.addr %s23, 6
          %s318 = sadd.s32 %s313, %s317
          %s319 = smul.addr %s318, 128
          %s320 = scalar_lea.hbm %s2, %s319
          %s321 = sshll.u32 %s309, 4
          %s322 = int_to_ptr.vmem [resolvable:$true] %s321
          %327 = dma.vmem_to_hbm [thread:$0]  %s322, 768, %s320, %s306, 256, 256, 16
        $region36: #{tpu_custom_call.1} parent=27 // pred_fallthru
          _
      $region28: #{tpu_custom_call.1} parent=5 // pred_fallthru
        _
      %p328 = scmp.le.s32.totalorder 2, %s14
      // Predicated region
      $region37: #{tpu_custom_call.1} parent=5 // pred_check
        %p329 = pneg %p328
      $region38: #{tpu_custom_call.1} parent=5 // pred_check_branch
        %331 = sbr.rel (%p329) target = $region40
      $region39: #{tpu_custom_call.1} parent=5 // pred_region
        %s332 = ssub.s32 %s14, 2
        // Predicated region
        $region41: #{tpu_custom_call.1} parent=39 // pred_check
          %p333 = pneg %p106
        $region42: #{tpu_custom_call.1} parent=39 // pred_check_branch
          %335 = sbr.rel (%p333) target = $region44
        $region43: #{tpu_custom_call.1} parent=39 // pred_region
          %s336 = sand.u32 %s91, 1
          %s337 = scalar_lea.sflag [#allocation4], %s336
          %s338 = sand.u32 %s91, 1
          %s339 = smul.addr %s338, 48
          %s340 = scalar_lea.vmem [#allocation5], %s339
          %341 = dma.done %s337, 768
        $region44: #{tpu_custom_call.1} parent=39 // pred_fallthru
          _
      $region40: #{tpu_custom_call.1} parent=5 // pred_fallthru
        _
    $region6: #{tpu_custom_call.1} parent=1 // loop_footer
      %s18 = sadd.s32 1, %s14
    $region7: #{tpu_custom_call.1} parent=1 // loop_footer_branch
      %13 = sbr.rel target = $region3
    $region8: #{tpu_custom_call.1} parent=1 // loop_exit
      _
    %342 = vsyncpa [#allocation3], 1
    %s343 = scalar_lea.sflag [#allocation3], 1
    %344 = vsyncpa %s343, 1
    %345 = vsyncpa [#allocation4], 1
    %s346 = scalar_lea.sflag [#allocation4], 1
    %347 = vsyncpa %s346, 1

</llo_original>
